<compile_context>
chip_gen: v7x
topology: tpu7x:2x2x1
jax: 0.10.0
libtpu: 0.0.40
codegen_flags: <defaults>
</compile_context>

<pallas_src>
import functools
import math

import jax
import jax.numpy as jnp
from jax.experimental import pallas as pl
from jax.experimental.pallas import tpu as pltpu


def actor_kernel(state_ref, noise_ref, w_ref, b_ref, out_ref, *,
                 hidden_dim, action_dim, log_std_min, log_std_max):
    """Fused SAC actor forward: 3-layer MLP + tanh-squashed Gaussian head."""
    F = state_ref.shape[1]
    F8 = (F + 7) // 8 * 8          # layer-2/3 weight blocks start 8-aligned
    H = hidden_dim
    A = action_dim

    x = state_ref[...]             # [Bt, F]
    noise = noise_ref[...]         # [Bt, A]
    w = w_ref[...]                 # [F8 + 2H, H] packed (W1 | W2 | W3 zero-padded)
    b = b_ref[...]                 # [3, H]       packed (b1 | b2 | b3 zero-padded)

    w1 = w[0:F, :]
    w2 = w[F8:F8 + H, :]
    w3 = w[F8 + H:F8 + 2 * H, :]   # cols >= 2A are zero

    h = jnp.dot(x, w1, preferred_element_type=jnp.float32) + b[0:1, :]
    h = jnp.maximum(h, 0.0)
    h = jnp.dot(h, w2, preferred_element_type=jnp.float32) + b[1:2, :]
    h = jnp.maximum(h, 0.0)
    out = jnp.dot(h, w3, preferred_element_type=jnp.float32) + b[2:3, :]  # [Bt, H]

    mu = out[:, 0:A]
    log_std = jnp.tanh(out[:, A:2 * A])
    log_std = log_std_min + 0.5 * (log_std_max - log_std_min) * (log_std + 1.0)

    std = jnp.exp(log_std)
    pi = mu + noise * std

    # gaussian_logprob
    log_pi = jnp.sum(-0.5 * noise * noise - log_std, axis=-1, keepdims=True)
    log_pi = log_pi - 0.5 * math.log(2.0 * math.pi) * A

    # squash
    mu_t = jnp.tanh(mu)
    pi_t = jnp.tanh(pi)
    log_pi = log_pi - jnp.sum(
        jnp.log(jnp.maximum(1.0 - pi_t * pi_t, 0.0) + 1e-6),
        axis=-1, keepdims=True)

    # single lane-merged output: [mu | pi | log_std | log_pi] -> [Bt, 3A+1]
    out_ref[...] = jnp.concatenate([mu_t, pi_t, log_std, log_pi], axis=-1)


def init_params(key, feature_dim, action_dim, hidden_dim):
    """Deterministic synthetic init (stand-in for utils.weight_init)."""
    # TODO(synk): utils.weight_init (orthogonal init) is init-time only and is
    # not replicated; forward-pass semantics are unaffected.
    d_out = 2 * action_dim
    shapes = [(feature_dim, hidden_dim), (hidden_dim,),
              (hidden_dim, hidden_dim), (hidden_dim,),
              (hidden_dim, d_out), (d_out,)]
    params = []
    for shp in shapes:
        key, sub = jax.random.split(key)
        params.append(0.1 * jax.random.normal(sub, shp, dtype=jnp.float32))
    return tuple(params)


def pack_params(params, feature_dim, action_dim, hidden_dim):
    """Pack all layer weights into one slab and all biases into one array."""
    w1, b1, w2, b2, w3, b3 = params
    H, d_out = hidden_dim, 2 * action_dim
    assert H >= d_out, "packing assumes hidden_dim >= 2*action_dim"
    F8 = (feature_dim + 7) // 8 * 8
    w_packed = jnp.zeros((F8 + 2 * H, H), jnp.float32)
    w_packed = w_packed.at[0:feature_dim, :].set(w1)
    w_packed = w_packed.at[F8:F8 + H, :].set(w2)
    w_packed = w_packed.at[F8 + H:F8 + 2 * H, 0:d_out].set(w3)
    b_packed = jnp.zeros((3, H), jnp.float32)
    b_packed = b_packed.at[0, :].set(b1)
    b_packed = b_packed.at[1, :].set(b2)
    b_packed = b_packed.at[2, 0:d_out].set(b3)
    return w_packed, b_packed


def actor_forward(state, noise, w_packed, b_packed, *,
                  action_dim, hidden_dim, log_std_min, log_std_max):
    state = state.astype(jnp.float32)
    noise = noise.astype(jnp.float32)
    B, F = state.shape
    A = action_dim
    out_dim = 3 * A + 1

    # pad batch to a multiple of 8 (sublane granularity) if necessary
    Bp = (B + 7) // 8 * 8
    if Bp != B:
        state = jnp.pad(state, ((0, Bp - B), (0, 0)))
        noise = jnp.pad(noise, ((0, Bp - B), (0, 0)))
    B_TILE = 128 if Bp % 128 == 0 else Bp
    grid = (Bp // B_TILE,)

    kernel = functools.partial(
        actor_kernel, hidden_dim=hidden_dim, action_dim=A,
        log_std_min=float(log_std_min), log_std_max=float(log_std_max))

    out = pl.pallas_call(
        kernel,
        out_shape=jax.ShapeDtypeStruct((Bp, out_dim), jnp.float32),
        grid=grid,
        in_specs=[
            pl.BlockSpec((B_TILE, F), lambda i: (i, 0)),      # state tiles (pipelined)
            pl.BlockSpec((B_TILE, A), lambda i: (i, 0)),      # noise tiles (pipelined)
            pl.BlockSpec(w_packed.shape, lambda i: (0, 0)),   # weights VMEM-resident
            pl.BlockSpec(b_packed.shape, lambda i: (0, 0)),   # biases VMEM-resident
        ],
        out_specs=pl.BlockSpec((B_TILE, out_dim), lambda i: (i, 0)),
        compiler_params=pltpu.CompilerParams(
            dimension_semantics=("parallel",)),
    )(state, noise, w_packed, b_packed)

    out = out[:B]
    mu = out[:, 0:A]
    pi = out[:, A:2 * A]
    log_std = out[:, 2 * A:3 * A]
    log_pi = out[:, 3 * A:3 * A + 1]
    return mu, pi, log_pi, log_std


def actor_reference(state, noise, params, log_std_min, log_std_max):
    """Pure-JAX reference mirroring the PyTorch StochasticActor.forward."""
    w1, b1, w2, b2, w3, b3 = params
    state = state.astype(jnp.float32)
    A = noise.shape[1]
    h = jnp.maximum(state @ w1 + b1, 0.0)
    h = jnp.maximum(h @ w2 + b2, 0.0)
    out = h @ w3 + b3
    mu, log_std = out[:, :A], out[:, A:]
    log_std = jnp.tanh(log_std)
    log_std = log_std_min + 0.5 * (log_std_max - log_std_min) * (log_std + 1.0)
    std = jnp.exp(log_std)
    pi = mu + noise * std
    log_pi = jnp.sum(-0.5 * noise ** 2 - log_std, axis=-1, keepdims=True)
    log_pi = log_pi - 0.5 * math.log(2.0 * math.pi) * A
    mu = jnp.tanh(mu)
    pi = jnp.tanh(pi)
    log_pi = log_pi - jnp.sum(
        jnp.log(jnp.maximum(1.0 - pi ** 2, 0.0) + 1e-6), axis=-1, keepdims=True)
    return mu, pi, log_pi, log_std


if __name__ == "__main__":
    feature_dim, action_dim, hidden_dim = 20, 6, 32
    log_std_min, log_std_max = -10.0, 2.0
    batch = 8

    key = jax.random.PRNGKey(0)
    k_state, k_noise, k_params = jax.random.split(key, 3)

    state = jax.random.normal(k_state, (batch, feature_dim), dtype=jnp.float32)
    # torch.randn_like(mu) equivalent, generated once in the wrapper
    noise = jax.random.normal(k_noise, (batch, action_dim), dtype=jnp.float32)

    params = init_params(k_params, feature_dim, action_dim, hidden_dim)
    w_packed, b_packed = pack_params(params, feature_dim, action_dim, hidden_dim)

    mu, pi, log_pi, log_std = actor_forward(
        state, noise, w_packed, b_packed,
        action_dim=action_dim, hidden_dim=hidden_dim,
        log_std_min=log_std_min, log_std_max=log_std_max)
    jax.block_until_ready((mu, pi, log_pi, log_std))

    r_mu, r_pi, r_log_pi, r_log_std = actor_reference(
        state, noise, params, log_std_min, log_std_max)

    assert mu.shape == (batch, action_dim)
    assert pi.shape == (batch, action_dim)
    assert log_pi.shape == (batch, 1)
    assert log_std.shape == (batch, action_dim)
    assert jnp.allclose(mu, r_mu, atol=1e-5, rtol=1e-5)
    assert jnp.allclose(pi, r_pi, atol=1e-5, rtol=1e-5)
    assert jnp.allclose(log_std, r_log_std, atol=1e-5, rtol=1e-5)
    assert jnp.allclose(log_pi, r_log_pi, atol=1e-4, rtol=1e-4)

    print("KERNEL_OK")
</pallas_src>

<mosaic_0001>
module attributes {stable_mosaic.version = 11 : i64} {
  func.func @actor_kernel(%arg0: i32, %arg1: memref<8x20xf32, #tpu.memory_space<vmem>>, %arg2: memref<8x6xf32, #tpu.memory_space<vmem>>, %arg3: memref<88x32xf32, #tpu.memory_space<vmem>>, %arg4: memref<3x32xf32, #tpu.memory_space<vmem>>, %arg5: memref<8x19xf32, #tpu.memory_space<vmem>>) attributes {dimension_semantics = [#tpu.dimension_semantics<parallel>], iteration_bounds = array<i64: 1>, scalar_prefetch = 0 : i64, scratch_operands = 0 : i64, tpu.core_type = #tpu.core_type<tc>, window_params = [{transform_indices = @transform_0, window_bounds = array<i64: 8, 20>}, {transform_indices = @transform_1, window_bounds = array<i64: 8, 6>}, {pipeline_mode = #tpu.pipeline_mode<synchronous>, transform_indices = @transform_2, window_bounds = array<i64: 88, 32>}, {pipeline_mode = #tpu.pipeline_mode<synchronous>, transform_indices = @transform_3, window_bounds = array<i64: 3, 32>}, {transform_indices = @transform_4, window_bounds = array<i64: 8, 19>}]} {
    %c0 = arith.constant 0 : index
    %c0_0 = arith.constant 0 : index
    %0 = vector.load %arg1[%c0, %c0_0] : memref<8x20xf32, #tpu.memory_space<vmem>>, vector<8x20xf32>
    %c0_1 = arith.constant 0 : index
    %c0_2 = arith.constant 0 : index
    %1 = vector.load %arg2[%c0_1, %c0_2] : memref<8x6xf32, #tpu.memory_space<vmem>>, vector<8x6xf32>
    %c0_3 = arith.constant 0 : index
    %c0_4 = arith.constant 0 : index
    %2 = vector.load %arg3[%c0_3, %c0_4] : memref<88x32xf32, #tpu.memory_space<vmem>>, vector<88x32xf32>
    %c0_5 = arith.constant 0 : index
    %c0_6 = arith.constant 0 : index
    %3 = vector.load %arg4[%c0_5, %c0_6] : memref<3x32xf32, #tpu.memory_space<vmem>>, vector<3x32xf32>
    %4 = vector.extract_strided_slice %2 {offsets = [0, 0], sizes = [20, 32], strides = [1, 1]} : vector<88x32xf32> to vector<20x32xf32>
    %5 = vector.extract_strided_slice %2 {offsets = [24, 0], sizes = [32, 32], strides = [1, 1]} : vector<88x32xf32> to vector<32x32xf32>
    %6 = vector.extract_strided_slice %2 {offsets = [56, 0], sizes = [32, 32], strides = [1, 1]} : vector<88x32xf32> to vector<32x32xf32>
    %cst = arith.constant dense<0.000000e+00> : vector<8x32xf32>
    %7 = tpu.matmul %0, %4, %cst {dimension_numbers = #tpu.dot_dimension_numbers<[1], [0], [0], [1], [0, 0, 1, 1], [], []>} : vector<8x20xf32>, vector<20x32xf32>, vector<8x32xf32> -> vector<8x32xf32>
    %8 = vector.extract_strided_slice %3 {offsets = [0, 0], sizes = [1, 32], strides = [1, 1]} : vector<3x32xf32> to vector<1x32xf32>
    %9 = vector.broadcast %8 : vector<1x32xf32> to vector<8x32xf32>
    %10 = arith.addf %7, %9 : vector<8x32xf32>
    %cst_7 = arith.constant 0.000000e+00 : f32
    %11 = vector.broadcast %cst_7 : f32 to vector<8x32xf32>
    %12 = arith.maximumf %10, %11 : vector<8x32xf32>
    %cst_8 = arith.constant dense<0.000000e+00> : vector<8x32xf32>
    %13 = tpu.matmul %12, %5, %cst_8 {dimension_numbers = #tpu.dot_dimension_numbers<[1], [0], [0], [1], [0, 0, 1, 1], [], []>} : vector<8x32xf32>, vector<32x32xf32>, vector<8x32xf32> -> vector<8x32xf32>
    %14 = vector.extract_strided_slice %3 {offsets = [1, 0], sizes = [1, 32], strides = [1, 1]} : vector<3x32xf32> to vector<1x32xf32>
    %15 = vector.broadcast %14 : vector<1x32xf32> to vector<8x32xf32>
    %16 = arith.addf %13, %15 : vector<8x32xf32>
    %cst_9 = arith.constant 0.000000e+00 : f32
    %17 = vector.broadcast %cst_9 : f32 to vector<8x32xf32>
    %18 = arith.maximumf %16, %17 : vector<8x32xf32>
    %cst_10 = arith.constant dense<0.000000e+00> : vector<8x32xf32>
    %19 = tpu.matmul %18, %6, %cst_10 {dimension_numbers = #tpu.dot_dimension_numbers<[1], [0], [0], [1], [0, 0, 1, 1], [], []>} : vector<8x32xf32>, vector<32x32xf32>, vector<8x32xf32> -> vector<8x32xf32>
    %20 = vector.extract_strided_slice %3 {offsets = [2, 0], sizes = [1, 32], strides = [1, 1]} : vector<3x32xf32> to vector<1x32xf32>
    %21 = vector.broadcast %20 : vector<1x32xf32> to vector<8x32xf32>
    %22 = arith.addf %19, %21 : vector<8x32xf32>
    %23 = vector.extract_strided_slice %22 {offsets = [0, 0], sizes = [8, 6], strides = [1, 1]} : vector<8x32xf32> to vector<8x6xf32>
    %24 = vector.extract_strided_slice %22 {offsets = [0, 6], sizes = [8, 6], strides = [1, 1]} : vector<8x32xf32> to vector<8x6xf32>
    %25 = math.tanh %24 : vector<8x6xf32>
    %cst_11 = arith.constant 1.000000e+00 : f32
    %26 = vector.broadcast %cst_11 : f32 to vector<8x6xf32>
    %27 = arith.addf %25, %26 : vector<8x6xf32>
    %cst_12 = arith.constant 6.000000e+00 : f32
    %28 = vector.broadcast %cst_12 : f32 to vector<8x6xf32>
    %29 = arith.mulf %28, %27 : vector<8x6xf32>
    %cst_13 = arith.constant -1.000000e+01 : f32
    %30 = vector.broadcast %cst_13 : f32 to vector<8x6xf32>
    %31 = arith.addf %30, %29 : vector<8x6xf32>
    %32 = math.exp %31 : vector<8x6xf32>
    %33 = arith.mulf %1, %32 : vector<8x6xf32>
    %34 = arith.addf %23, %33 : vector<8x6xf32>
    %cst_14 = arith.constant -5.000000e-01 : f32
    %35 = vector.broadcast %cst_14 : f32 to vector<8x6xf32>
    %36 = arith.mulf %35, %1 : vector<8x6xf32>
    %37 = arith.mulf %36, %1 : vector<8x6xf32>
    %38 = arith.subf %37, %31 : vector<8x6xf32>
    %cst_15 = arith.constant dense<0.000000e+00> : vector<8xf32>
    %39 = vector.multi_reduction <add>, %38, %cst_15 [1] : vector<8x6xf32> to vector<8xf32>
    %40 = vector.shape_cast %39 : vector<8xf32> to vector<8x1xf32>
    %cst_16 = arith.constant 5.51363134 : f32
    %41 = vector.broadcast %cst_16 : f32 to vector<8x1xf32>
    %42 = arith.subf %40, %41 : vector<8x1xf32>
    %43 = math.tanh %23 : vector<8x6xf32>
    %44 = math.tanh %34 : vector<8x6xf32>
    %45 = arith.mulf %44, %44 : vector<8x6xf32>
    %cst_17 = arith.constant 1.000000e+00 : f32
    %46 = vector.broadcast %cst_17 : f32 to vector<8x6xf32>
    %47 = arith.subf %46, %45 : vector<8x6xf32>
    %cst_18 = arith.constant 0.000000e+00 : f32
    %48 = vector.broadcast %cst_18 : f32 to vector<8x6xf32>
    %49 = arith.maximumf %47, %48 : vector<8x6xf32>
    %cst_19 = arith.constant 9.99999997E-7 : f32
    %50 = vector.broadcast %cst_19 : f32 to vector<8x6xf32>
    %51 = arith.addf %49, %50 : vector<8x6xf32>
    %52 = math.log %51 : vector<8x6xf32>
    %cst_20 = arith.constant dense<0.000000e+00> : vector<8xf32>
    %53 = vector.multi_reduction <add>, %52, %cst_20 [1] : vector<8x6xf32> to vector<8xf32>
    %54 = vector.shape_cast %53 : vector<8xf32> to vector<8x1xf32>
    %55 = arith.subf %42, %54 : vector<8x1xf32>
    %56 = tpu.concatenate %43, %44, %31, %55 in 1 : vector<8x6xf32>, vector<8x6xf32>, vector<8x6xf32>, vector<8x1xf32> -> vector<8x19xf32>
    %c0_21 = arith.constant 0 : index
    %c0_22 = arith.constant 0 : index
    %57 = vector.load %arg5[%c0_21, %c0_22] : memref<8x19xf32, #tpu.memory_space<vmem>>, vector<8x19xf32>
    tpu.vector_store %arg5[%c0_21, %c0_22], %56 {strides = array<i32>} : memref<8x19xf32, #tpu.memory_space<vmem>>, vector<8x19xf32>,
    return
  }
  func.func @transform_0(%arg0: i32) -> (i32, i32) {
    %c0_i32 = arith.constant 0 : i32
    %c0_i32_0 = arith.constant 0 : i32
    return %arg0, %c0_i32 : i32, i32
  }
  func.func @transform_1(%arg0: i32) -> (i32, i32) {
    %c0_i32 = arith.constant 0 : i32
    %c0_i32_0 = arith.constant 0 : i32
    return %arg0, %c0_i32 : i32, i32
  }
  func.func @transform_2(%arg0: i32) -> (i32, i32) {
    %c0_i32 = arith.constant 0 : i32
    %c0_i32_0 = arith.constant 0 : i32
    %c0_i32_1 = arith.constant 0 : i32
    return %c0_i32, %c0_i32_0 : i32, i32
  }
  func.func @transform_3(%arg0: i32) -> (i32, i32) {
    %c0_i32 = arith.constant 0 : i32
    %c0_i32_0 = arith.constant 0 : i32
    %c0_i32_1 = arith.constant 0 : i32
    return %c0_i32, %c0_i32_0 : i32, i32
  }
  func.func @transform_4(%arg0: i32) -> (i32, i32) {
    %c0_i32 = arith.constant 0 : i32
    %c0_i32_0 = arith.constant 0 : i32
    return %arg0, %c0_i32 : i32, i32
  }
}

</mosaic_0001>

<llo_original>
// kernel: tpu_custom_call.1
$region0: #{tpu_custom_call.1}
  #allocation0 [shape = 'u32[]', space=smem, size = 0x4, offset = 0x4, fixed_abs, tag = 'smem constant byte address 0x4 - core index']
  #allocation1 [shape = 'u32[144,128]{1,0:T(1,128)}', space=vmem, size = 0x12000, scoped, tag = 'internal scratch']
  %s0 = inlined_call_operand.vmem [shape: f32[8,20], index: 0, kind: input, shape index: {}]
  %s1 = inlined_call_operand.vmem [shape: f32[8,6], index: 1, kind: input, shape index: {}]
  %s2 = inlined_call_operand.vmem [shape: f32[88,32], index: 2, kind: input, shape index: {}]
  %s3 = inlined_call_operand.vmem [shape: f32[3,32], index: 3, kind: input, shape index: {}]
  %s4 = inlined_call_operand.hbm [shape: f32[8,19], index: 4, kind: output, shape index: {}]
  %s5 = sld [smem:[#allocation0]]
  $region26: #{tpu_custom_call.1} parent=0
    _
  %s7 = ssub.s32 1, %s5
  %s8 = scalar_select 0, %s7, %s5
  $region1: #{tpu_custom_call.1} parent=0
    #allocation2 [shape = 'u8[4096]{0}', space=vmem, size = 0x1000, scoped, tag = 'output window, operand 0, single buffered']
    #allocation3 [shape = 's32[1]{0}', space=sflag, size = 0x4, scoped, tag = 'scoped memory for tpu_custom_call.1']
    %9 = vsyncpa [#allocation3], 0
    // Predicated region
    $region2: #{tpu_custom_call.1} parent=1 // pred_check
      _
    $region3: #{tpu_custom_call.1} parent=1 // pred_check_branch
      %11 = sbr.rel (0) target = $region5
    $region4: #{tpu_custom_call.1} parent=1 // pred_region
      _
    $region5: #{tpu_custom_call.1} parent=1 // pred_fallthru
      _
    // Predicated region
    $region6: #{tpu_custom_call.1} parent=1 // pred_check
      _
    $region7: #{tpu_custom_call.1} parent=1 // pred_check_branch
      %13 = sbr.rel (0) target = $region9
    $region8: #{tpu_custom_call.1} parent=1 // pred_region
      _
    $region9: #{tpu_custom_call.1} parent=1 // pred_fallthru
      _
    // Predicated region
    $region10: #{tpu_custom_call.1} parent=1 // pred_check
      _
    $region11: #{tpu_custom_call.1} parent=1 // pred_check_branch
      %15 = sbr.rel (0) target = $region13
    $region12: #{tpu_custom_call.1} parent=1 // pred_region
      _
    $region13: #{tpu_custom_call.1} parent=1 // pred_fallthru
      _
    // Predicated region
    $region14: #{tpu_custom_call.1} parent=1 // pred_check
      _
    $region15: #{tpu_custom_call.1} parent=1 // pred_check_branch
      %17 = sbr.rel (0) target = $region17
    $region16: #{tpu_custom_call.1} parent=1 // pred_region
      _
    $region17: #{tpu_custom_call.1} parent=1 // pred_fallthru
      _
    %v18 = vld [vmem:[%s0] sm:$0xff]
    %v19 = vld [vmem:[%s1] sm:$0xff]
    %v20 = vld [vmem:[%s2] sm:$0xff]
    %v21 = vld [vmem:[%s2 + $0x8] sm:$0xff]
    %v22 = vld [vmem:[%s2 + $0x10] sm:$0xff]
    %v23 = vld [vmem:[%s2 + $0x18] sm:$0xff]
    %v24 = vld [vmem:[%s2 + $0x20] sm:$0xff]
    %v25 = vld [vmem:[%s2 + $0x28] sm:$0xff]
    %v26 = vld [vmem:[%s2 + $0x30] sm:$0xff]
    %v27 = vld [vmem:[%s2 + $0x38] sm:$0xff]
    %v28 = vld [vmem:[%s2 + $0x40] sm:$0xff]
    %v29 = vld [vmem:[%s2 + $0x48] sm:$0xff]
    %v30 = vld [vmem:[%s2 + $0x50] sm:$0xff]
    %v31 = vld [vmem:[%s3] sm:$0x7]
    %v32 = vlaneseq
    %v33 = vshrl.u32 %v32, 7
    %v34 = vsub.s32 0, %v33
    %v35 = vrot.slane %v31, %v34
    %vm36 = vcmask 162816
    %v38 = vsel %vm36, %v18, 0
    %vm40 = vcmask 1043456
    %v42 = vsel %vm40, %v22, 0
    %44 = vmatprep.subr.mxu0 0.0
    %45 = vmatpush1.msra.mxu0 %v20
    %46 = vmatprep.subr.mxu0 0.0
    %47 = vmatpush1.msra.mxu0 %v21
    %48 = vmatprep.subr.mxu0 0.0
    %49 = vmatpush1.msra.mxu0 %v42
    %50 = vmatprep.subr.mxu0 0.0
    %51 = vmatpush1.msra.mxu0 0.0
    %52 = vmatprep.subr.mxu0 0.0
    %53 = vmatpush1.msra.mxu0 0.0
    %54 = vmatprep.subr.mxu0 0.0
    %55 = vmatpush1.msra.mxu0 0.0
    %56 = vmatprep.subr.mxu0 0.0
    %57 = vmatpush1.msra.mxu0 0.0
    %58 = vmatprep.subr.mxu0 0.0
    %59 = vmatpush1.msra.mxu0 0.0
    %60 = vmatprep.subr.mxu0 0.0
    %61 = vmatpush1.msra.mxu0 0.0
    %62 = vmatprep.subr.mxu0 0.0
    %63 = vmatpush1.msra.mxu0 0.0
    %64 = vmatprep.subr.mxu0 0.0
    %65 = vmatpush1.msra.mxu0 0.0
    %66 = vmatprep.subr.mxu0 0.0
    %67 = vmatpush1.msra.mxu0 0.0
    %68 = vmatprep.subr.mxu0 0.0
    %69 = vmatpush1.msra.mxu0 0.0
    %70 = vmatprep.subr.mxu0 0.0
    %71 = vmatpush1.msra.mxu0 0.0
    %72 = vmatprep.subr.mxu0 0.0
    %73 = vmatpush1.msra.mxu0 0.0
    %74 = vmatprep.subr.mxu0 0.0
    %75 = vmatpush1.msra.mxu0 0.0
    %76 = vmatprep.subr.mxu0 0.0
    %77 = vmatpush1.msra.mxu0 0.0
    %78 = vmatprep.subr.mxu0 0.0
    %79 = vmatpush1.msra.mxu0 0.0
    %80 = vmatprep.subr.mxu0 0.0
    %81 = vmatpush1.msra.mxu0 0.0
    %82 = vmatprep.subr.mxu0 0.0
    %83 = vmatpush1.msra.mxu0 0.0
    %84 = vmatprep.subr.mxu0 0.0
    %85 = vmatpush1.msra.mxu0 0.0
    %86 = vmatprep.subr.mxu0 0.0
    %87 = vmatpush1.msra.mxu0 0.0
    %88 = vmatprep.subr.mxu0 0.0
    %89 = vmatpush1.msra.mxu0 0.0
    %90 = vmatprep.subr.mxu0 0.0
    %91 = vmatpush1.msra.mxu0 0.0
    %92 = vmatprep.subr.mxu0 0.0
    %93 = vmatpush1.msra.mxu0 0.0
    %94 = vmatprep.subr.mxu0 0.0
    %95 = vmatpush1.msra.mxu0 0.0
    %96 = vmatprep.subr.mxu0 0.0
    %97 = vmatpush1.msra.mxu0 0.0
    %98 = vmatprep.subr.mxu0 0.0
    %99 = vmatpush1.msra.mxu0 0.0
    %100 = vmatprep.subr.mxu0 0.0
    %101 = vmatpush1.msra.mxu0 0.0
    %102 = vmatprep.subr.mxu0 0.0
    %103 = vmatpush1.msra.mxu0 0.0
    %104 = vmatprep.subr.mxu0 0.0
    %105 = vmatpush1.msra.mxu0 0.0
    %106 = vmatprep.subr.mxu0 0.0
    %107 = vmatpush1.msra.mxu0 0.0
    %108 = vmatprep.mubr.f32.mxu0 0.0
    %109 = vmatmul.mubr.f32.gmra.mrb[0].mxu0 %v38
    %v110 = vpop.f32.mrb[0].mxu0
    %v111 = vadd.f32 %v35, %v110
    %v112 = vpop.f32.mrb[0].mxu0
    %113 = vdwg.mxu0
    %v114 = vmax.f32 %v111, 0.0
    %v115 = vlaneseq
    %v116 = vshrl.u32 %v115, 7
    %v117 = vsub.s32 1, %v116
    %v118 = vrot.slane %v31, %v117
    %vm119 = vcmask 261120
    %v121 = vsel %vm119, %v114, 0
    %123 = vmatprep.subr.mxu0 0.0
    %124 = vmatpush1.msra.mxu0 %v23
    %125 = vmatprep.subr.mxu0 0.0
    %126 = vmatpush1.msra.mxu0 %v24
    %127 = vmatprep.subr.mxu0 0.0
    %128 = vmatpush1.msra.mxu0 %v25
    %129 = vmatprep.subr.mxu0 0.0
    %130 = vmatpush1.msra.mxu0 %v26
    %131 = vmatprep.subr.mxu0 0.0
    %132 = vmatpush1.msra.mxu0 0.0
    %133 = vmatprep.subr.mxu0 0.0
    %134 = vmatpush1.msra.mxu0 0.0
    %135 = vmatprep.subr.mxu0 0.0
    %136 = vmatpush1.msra.mxu0 0.0
    %137 = vmatprep.subr.mxu0 0.0
    %138 = vmatpush1.msra.mxu0 0.0
    %139 = vmatprep.subr.mxu0 0.0
    %140 = vmatpush1.msra.mxu0 0.0
    %141 = vmatprep.subr.mxu0 0.0
    %142 = vmatpush1.msra.mxu0 0.0
    %143 = vmatprep.subr.mxu0 0.0
    %144 = vmatpush1.msra.mxu0 0.0
    %145 = vmatprep.subr.mxu0 0.0
    %146 = vmatpush1.msra.mxu0 0.0
    %147 = vmatprep.subr.mxu0 0.0
    %148 = vmatpush1.msra.mxu0 0.0
    %149 = vmatprep.subr.mxu0 0.0
    %150 = vmatpush1.msra.mxu0 0.0
    %151 = vmatprep.subr.mxu0 0.0
    %152 = vmatpush1.msra.mxu0 0.0
    %153 = vmatprep.subr.mxu0 0.0
    %154 = vmatpush1.msra.mxu0 0.0
    %155 = vmatprep.subr.mxu0 0.0
    %156 = vmatpush1.msra.mxu0 0.0
    %157 = vmatprep.subr.mxu0 0.0
    %158 = vmatpush1.msra.mxu0 0.0
    %159 = vmatprep.subr.mxu0 0.0
    %160 = vmatpush1.msra.mxu0 0.0
    %161 = vmatprep.subr.mxu0 0.0
    %162 = vmatpush1.msra.mxu0 0.0
    %163 = vmatprep.subr.mxu0 0.0
    %164 = vmatpush1.msra.mxu0 0.0
    %165 = vmatprep.subr.mxu0 0.0
    %166 = vmatpush1.msra.mxu0 0.0
    %167 = vmatprep.subr.mxu0 0.0
    %168 = vmatpush1.msra.mxu0 0.0
    %169 = vmatprep.subr.mxu0 0.0
    %170 = vmatpush1.msra.mxu0 0.0
    %171 = vmatprep.subr.mxu0 0.0
    %172 = vmatpush1.msra.mxu0 0.0
    %173 = vmatprep.subr.mxu0 0.0
    %174 = vmatpush1.msra.mxu0 0.0
    %175 = vmatprep.subr.mxu0 0.0
    %176 = vmatpush1.msra.mxu0 0.0
    %177 = vmatprep.subr.mxu0 0.0
    %178 = vmatpush1.msra.mxu0 0.0
    %179 = vmatprep.subr.mxu0 0.0
    %180 = vmatpush1.msra.mxu0 0.0
    %181 = vmatprep.subr.mxu0 0.0
    %182 = vmatpush1.msra.mxu0 0.0
    %183 = vmatprep.subr.mxu0 0.0
    %184 = vmatpush1.msra.mxu0 0.0
    %185 = vmatprep.subr.mxu0 0.0
    %186 = vmatpush1.msra.mxu0 0.0
    %187 = vmatprep.mubr.f32.mxu0 0.0
    %188 = vmatmul.mubr.f32.gmra.mrb[0].mxu0 %v121
    %v189 = vpop.f32.mrb[0].mxu0
    %v190 = vadd.f32 %v118, %v189
    %v191 = vpop.f32.mrb[0].mxu0
    %192 = vdwg.mxu0
    %v193 = vmax.f32 %v190, 0.0
    %v194 = vlaneseq
    %v195 = vshrl.u32 %v194, 7
    %v196 = vsub.s32 2, %v195
    %v197 = vrot.slane %v31, %v196
    %v199 = vsel %vm119, %v193, 0
    %201 = vmatprep.subr.mxu0 0.0
    %202 = vmatpush1.msra.mxu0 %v27
    %203 = vmatprep.subr.mxu0 0.0
    %204 = vmatpush1.msra.mxu0 %v28
    %205 = vmatprep.subr.mxu0 0.0
    %206 = vmatpush1.msra.mxu0 %v29
    %207 = vmatprep.subr.mxu0 0.0
    %208 = vmatpush1.msra.mxu0 %v30
    %209 = vmatprep.subr.mxu0 0.0
    %210 = vmatpush1.msra.mxu0 0.0
    %211 = vmatprep.subr.mxu0 0.0
    %212 = vmatpush1.msra.mxu0 0.0
    %213 = vmatprep.subr.mxu0 0.0
    %214 = vmatpush1.msra.mxu0 0.0
    %215 = vmatprep.subr.mxu0 0.0
    %216 = vmatpush1.msra.mxu0 0.0
    %217 = vmatprep.subr.mxu0 0.0
    %218 = vmatpush1.msra.mxu0 0.0
    %219 = vmatprep.subr.mxu0 0.0
    %220 = vmatpush1.msra.mxu0 0.0
    %221 = vmatprep.subr.mxu0 0.0
    %222 = vmatpush1.msra.mxu0 0.0
    %223 = vmatprep.subr.mxu0 0.0
    %224 = vmatpush1.msra.mxu0 0.0
    %225 = vmatprep.subr.mxu0 0.0
    %226 = vmatpush1.msra.mxu0 0.0
    %227 = vmatprep.subr.mxu0 0.0
    %228 = vmatpush1.msra.mxu0 0.0
    %229 = vmatprep.subr.mxu0 0.0
    %230 = vmatpush1.msra.mxu0 0.0
    %231 = vmatprep.subr.mxu0 0.0
    %232 = vmatpush1.msra.mxu0 0.0
    %233 = vmatprep.subr.mxu0 0.0
    %234 = vmatpush1.msra.mxu0 0.0
    %235 = vmatprep.subr.mxu0 0.0
    %236 = vmatpush1.msra.mxu0 0.0
    %237 = vmatprep.subr.mxu0 0.0
    %238 = vmatpush1.msra.mxu0 0.0
    %239 = vmatprep.subr.mxu0 0.0
    %240 = vmatpush1.msra.mxu0 0.0
    %241 = vmatprep.subr.mxu0 0.0
    %242 = vmatpush1.msra.mxu0 0.0
    %243 = vmatprep.subr.mxu0 0.0
    %244 = vmatpush1.msra.mxu0 0.0
    %245 = vmatprep.subr.mxu0 0.0
    %246 = vmatpush1.msra.mxu0 0.0
    %247 = vmatprep.subr.mxu0 0.0
    %248 = vmatpush1.msra.mxu0 0.0
    %249 = vmatprep.subr.mxu0 0.0
    %250 = vmatpush1.msra.mxu0 0.0
    %251 = vmatprep.subr.mxu0 0.0
    %252 = vmatpush1.msra.mxu0 0.0
    %253 = vmatprep.subr.mxu0 0.0
    %254 = vmatpush1.msra.mxu0 0.0
    %255 = vmatprep.subr.mxu0 0.0
    %256 = vmatpush1.msra.mxu0 0.0
    %257 = vmatprep.subr.mxu0 0.0
    %258 = vmatpush1.msra.mxu0 0.0
    %259 = vmatprep.subr.mxu0 0.0
    %260 = vmatpush1.msra.mxu0 0.0
    %261 = vmatprep.subr.mxu0 0.0
    %262 = vmatpush1.msra.mxu0 0.0
    %263 = vmatprep.subr.mxu0 0.0
    %264 = vmatpush1.msra.mxu0 0.0
    %265 = vmatprep.mubr.f32.mxu0 0.0
    %266 = vmatmul.mubr.f32.gmra.mrb[0].mxu0 %v199
    %v267 = vpop.f32.mrb[0].mxu0
    %v268 = vadd.f32 %v197, %v267
    %v269 = vpop.f32.mrb[0].mxu0
    %270 = vdwg.mxu0
    %v271 = vtanh.pop %v268
    %v272 = vadd.f32 %v271, 1.0
    %v273 = vmul.f32 %v272, 6.0
    %v274 = vadd.f32 %v273, -10.0
    %v275 = vmul.f32 %v274, 1.442695
    %v276 = vpow.pop %v275
    %278 = vrot.lane.b32.xlu0 %v276, 122
    %v279 = vpop.permute.xlu0 %278
    %v281 = vmul.f32 %v19, %v279
    %v282 = vadd.f32 %v268, %v281
    %v283 = vmul.f32 %v19, -0.5
    %v284 = vmul.f32 %v283, %v19
    %286 = vrot.lane.b32.xlu0 %v274, 122
    %v287 = vpop.permute.xlu0 %286
    %v289 = vsub.f32 %v284, %v287
    %vm290 = vcmask 48128
    %v291 = vsel %vm290, %v289, 0.0
    %292 = vadd.xlane.f32.xlu0 %v291
    %v293 = vpop.xlane.xlu0 %292
    %v294 = vsub.f32 %v293, 5.5136313
    %v295 = vtanh.pop %v282
    %v296 = vmul.f32 %v295, %v295
    %v297 = vsub.f32 1.0, %v296
    %v298 = vmax.f32 %v297, 0.0
    %v299 = vadd.f32 %v298, 1e-06
    %v300 = vlog2.pop %v299
    %v301 = vmul.f32 %v300, 0.6931472
    %v302 = vsel %vm290, %v301, 0.0
    %303 = vadd.xlane.f32.xlu0 %v302
    %v304 = vpop.xlane.xlu0 %303
    %v305 = vsub.f32 %v294, %v304
    %307 = vrot.lane.b32.xlu0 %v295, 6
    %v308 = vpop.permute.xlu0 %307
    %310 = vrot.lane.b32.xlu0 %v274, 6
    %v311 = vpop.permute.xlu0 %310
    %v313 = vsel %vm290, %v271, %v308
    %vm314 = vcmask 97280
    %v315 = vsel %vm314, %v313, %v311
    %vm316 = vcmask 146432
    %v317 = vsel %vm316, %v315, %v305
    %vm318 = vcmask 154624
    %319 = vst.msk [vmem:[#allocation2] sm:$0xff] %vm318, %v317
    // Predicated region
    $region18: #{tpu_custom_call.1} parent=1 // pred_check
      _
    $region19: #{tpu_custom_call.1} parent=1 // pred_check_branch
      %321 = sbr.rel (0) target = $region21
    $region20: #{tpu_custom_call.1} parent=1 // pred_region
      %s323 = ssub.s32 128, 128
      %324 = vsyncadd [#allocation3], %s323
      %s326 = sshll.u32 [#allocation2], 4
      %s327 = int_to_ptr.vmem [resolvable:$true] %s326
      %329 = dma.vmem_to_hbm [thread:$0]  %s327, 128, %s4, [#allocation3]
    $region21: #{tpu_custom_call.1} parent=1 // pred_fallthru
      _
    // Predicated region
    $region22: #{tpu_custom_call.1} parent=1 // pred_check
      _
    $region23: #{tpu_custom_call.1} parent=1 // pred_check_branch
      %331 = sbr.rel (0) target = $region25
    $region24: #{tpu_custom_call.1} parent=1 // pred_region
      %332 = dma.done [#allocation3], 128
    $region25: #{tpu_custom_call.1} parent=1 // pred_fallthru
      _
    %333 = vsyncpa [#allocation3], 1

</llo_original>
